<compile_context>
chip_gen: v5e
topology: v5e:2x2
jax: 0.10.0
libtpu: 0.0.40
codegen_flags: <defaults>
</compile_context>

<pallas_src>
import jax
import jax.numpy as jnp
from jax.experimental import pallas as pl
from jax.experimental.pallas import tpu as pltpu

NEG_SLOPE = 0.2          # leaky_relu negative_slope in reference module
BN_EPS = 1e-9            # BatchNorm1d eps in reference module


def _leaky_relu(x):
    return jnp.where(x > 0, x, NEG_SLOPE * x)


def make_gat_kernel(num_layer, hd):
    """Build a kernel computing the full multi-layer GAT forward in one step."""

    def kernel(*refs):
        f_in_ref, adj_ref = refs[0], refs[1]
        layer_refs = refs[2:2 + 2 * num_layer]
        out_ref = refs[2 + 2 * num_layer]

        adj = adj_ref[...]            # (N, N) dense adjacency values
        x = f_in_ref[...]             # (N, D_in)

        for l in range(num_layer):    # python loop -> unrolled at trace time
            wpack = layer_refs[2 * l][...]       # (2*D_in + 2*HD, HD)
            vpack = layer_refs[2 * l + 1][...]   # (4, HD)

            d_in = (wpack.shape[0] - 2 * hd) // 2
            ws = wpack[0:d_in]                       # (D_in, HD)
            wn = wpack[d_in:2 * d_in]                # (D_in, HD)
            as_rep = wpack[2 * d_in:2 * d_in + hd]   # (HD, HD)
            an_rep = wpack[2 * d_in + hd:2 * d_in + 2 * hd]
            bs = vpack[0:1]
            bn = vpack[1:2]
            gamma = vpack[2:3]
            beta = vpack[3:4]

            # self / neighbor branches, all heads fused: (N, HD)
            f_self = jnp.maximum(
                jnp.dot(x, ws, preferred_element_type=jnp.float32) + bs, 0.0)
            f_neigh = jnp.maximum(
                jnp.dot(x, wn, preferred_element_type=jnp.float32) + bn, 0.0)

            # per-head attention scores already expanded to all d_h columns of
            # each head via the folded (HD, HD) score matrices.
            # NOTE: reference module computes attention_neigh from f_self too.
            rep_self = _leaky_relu(
                jnp.dot(f_self, as_rep, preferred_element_type=jnp.float32))
            rep_neigh = _leaky_relu(
                jnp.dot(f_self, an_rep, preferred_element_type=jnp.float32))

            # masked-attention aggregation without materializing (N, N) att:
            #   att[r,c] = (a_self[r] + a_neigh[c]) * adj[r,c]
            #   att @ F  = rep(a_self) * (adj @ F) + adj @ (rep(a_neigh) * F)
            agg = jnp.dot(adj, f_neigh, preferred_element_type=jnp.float32)
            agg_w = jnp.dot(adj, rep_neigh * f_neigh,
                            preferred_element_type=jnp.float32)
            out = rep_self * agg + agg_w                    # (N, HD)

            # fused BatchNorm1d (training mode: batch stats, biased variance);
            # var = E[x^2] - E[x]^2 (clamped) shortens the dependency chain.
            mean = jnp.mean(out, axis=0, keepdims=True)
            mean_sq = jnp.mean(out * out, axis=0, keepdims=True)
            var = jnp.maximum(mean_sq - mean * mean, 0.0)
            x = (out - mean) * jax.lax.rsqrt(var + BN_EPS) * gamma + beta

        out_ref[...] = x.astype(out_ref.dtype)

    return kernel


def _pack_layer(Ws, Bs, Wn, Bn, As, An, gamma, beta):
    """Pack per-head params into two row-stacked, lane-dense slabs."""
    H, D_in, d_h = Ws.shape
    HD = H * d_h
    # head-major columns (matches torch.cat of per-head outputs along dim=1)
    ws = jnp.transpose(Ws, (1, 0, 2)).reshape(D_in, HD)
    wn = jnp.transpose(Wn, (1, 0, 2)).reshape(D_in, HD)
    bs = Bs.reshape(1, HD)
    bn = Bn.reshape(1, HD)
    # block-diagonal attention matrices: blk[h*d_h + k, h] = A[h, k, 0]
    eye = jnp.eye(H, dtype=Ws.dtype)                       # (H, H)
    as_blk = (As * eye[:, None, :]).reshape(HD, H)         # (HD, H)
    an_blk = (An * eye[:, None, :]).reshape(HD, H)
    # fold the head-expansion matrix E (0/1 column replication) into the
    # score matrices -> one (HD, HD) matmul per branch inside the kernel.
    E = jnp.repeat(eye, d_h, axis=1)                       # (H, HD)
    as_rep = as_blk @ E                                    # (HD, HD)
    an_rep = an_blk @ E
    # slab 1: weights + score matrices (row splits at multiples of 8)
    wpack = jnp.concatenate([ws, wn, as_rep, an_rep], axis=0)
    # slab 2: biases + BN affine params
    vpack = jnp.concatenate(
        [bs, bn, gamma.reshape(1, HD), beta.reshape(1, HD)], axis=0)
    return wpack, vpack


def gat_forward(f_in, adj, params):
    """params: list of per-layer (Ws, Bs, Wn, Bn, As, An, gamma, beta)."""
    num_layer = len(params)
    H, _, d_h = params[0][0].shape
    HD = H * d_h
    N = f_in.shape[0]

    flat_args = [f_in, adj]
    for layer in params:
        flat_args.extend(_pack_layer(*layer))

    def full_spec(shape):
        return pl.BlockSpec(shape, lambda i: tuple(0 for _ in shape))

    in_specs = [full_spec(a.shape) for a in flat_args]

    kernel = make_gat_kernel(num_layer, HD)
    return pl.pallas_call(
        kernel,
        out_shape=jax.ShapeDtypeStruct((N, HD), jnp.float32),
        grid_spec=pltpu.PrefetchScalarGridSpec(
            num_scalar_prefetch=0,
            grid=(1,),
            in_specs=in_specs,
            out_specs=full_spec((N, HD)),
        ),
        compiler_params=pltpu.CompilerParams(
            dimension_semantics=("arbitrary",)),
    )(*flat_args)


# ------------------------- parameter initialization -------------------------

def xavier_uniform(key, shape):
    fan_in, fan_out = shape[-2], shape[-1]
    bound = (6.0 / (fan_in + fan_out)) ** 0.5
    return jax.random.uniform(key, shape, jnp.float32, -bound, bound)


def init_params(key, num_layer, in_dim, out_dim, mulhead):
    d_h = out_dim // mulhead
    params = []
    for i in range(num_layer):
        din = in_dim if i == 0 else out_dim
        key, k1, k2, k3, k4 = jax.random.split(key, 5)
        Ws = xavier_uniform(k1, (mulhead, din, d_h))
        Wn = xavier_uniform(k2, (mulhead, din, d_h))
        Bs = jnp.zeros((mulhead, 1, d_h), jnp.float32)
        Bn = jnp.zeros((mulhead, 1, d_h), jnp.float32)
        # Module uses torch.nn.init.ones_; random values here exercise the
        # per-head attention math more strongly (forward semantics identical).
        As = jax.random.uniform(k3, (mulhead, d_h, 1), jnp.float32, 0.5, 1.5)
        An = jax.random.uniform(k4, (mulhead, d_h, 1), jnp.float32, 0.5, 1.5)
        gamma = jnp.ones((1, out_dim), jnp.float32)   # BatchNorm1d weight
        beta = jnp.zeros((1, out_dim), jnp.float32)   # BatchNorm1d bias
        params.append((Ws, Bs, Wn, Bn, As, An, gamma, beta))
    return params


# ------------------------------ pure-JAX reference ---------------------------

def gat_reference(f_in, adj, params):
    for (Ws, Bs, Wn, Bn, As, An, gamma, beta) in params:
        H = Ws.shape[0]
        outs = []
        for h in range(H):
            f_self = jax.nn.relu(f_in @ Ws[h] + Bs[h])
            a_self = jax.nn.leaky_relu(f_self @ As[h], NEG_SLOPE)
            f_neigh = jax.nn.relu(f_in @ Wn[h] + Bn[h])
            a_neigh = jax.nn.leaky_relu(f_self @ An[h], NEG_SLOPE)
            att = (a_self + a_neigh.T) * adj
            outs.append(att @ f_neigh)
        x = jnp.concatenate(outs, axis=1)
        mean = x.mean(0, keepdims=True)
        var = ((x - mean) ** 2).mean(0, keepdims=True)
        f_in = (x - mean) / jnp.sqrt(var + BN_EPS) * gamma + beta
    return f_in


if __name__ == "__main__":
    N, in_dim, out_dim, mulhead, num_layer = 32, 16, 32, 8, 2

    key = jax.random.PRNGKey(0)
    k_x, k_mask, k_val, k_params = jax.random.split(key, 4)

    x = jax.random.normal(k_x, (N, in_dim), jnp.float32)

    # deterministic sparse-ish adjacency (dense representation of COO buffer)
    mask = (jax.random.uniform(k_mask, (N, N)) < 0.3).astype(jnp.float32)
    mask = jnp.maximum(mask, jnp.eye(N, dtype=jnp.float32))   # self loops
    vals = jax.random.uniform(k_val, (N, N), jnp.float32, 0.5, 1.5)
    adj = mask * vals

    params = init_params(k_params, num_layer, in_dim, out_dim, mulhead)

    out = jax.jit(lambda xx: gat_forward(xx, adj, params))(x)
    out = jax.block_until_ready(out)

    ref = gat_reference(x, adj, params)
    assert out.shape == (N, out_dim), out.shape
    assert jnp.allclose(out, ref, rtol=1e-2, atol=1e-2), \
        float(jnp.max(jnp.abs(out - ref)))

    print("KERNEL_OK")
</pallas_src>

<mosaic_0001>
module attributes {stable_mosaic.version = 11 : i64} {
  func.func @kernel(%arg0: i32, %arg1: memref<32x16xf32, #tpu.memory_space<vmem>>, %arg2: memref<32x32xf32, #tpu.memory_space<vmem>>, %arg3: memref<96x32xf32, #tpu.memory_space<vmem>>, %arg4: memref<4x32xf32, #tpu.memory_space<vmem>>, %arg5: memref<128x32xf32, #tpu.memory_space<vmem>>, %arg6: memref<4x32xf32, #tpu.memory_space<vmem>>, %arg7: memref<32x32xf32, #tpu.memory_space<vmem>>) attributes {dimension_semantics = [#tpu.dimension_semantics<arbitrary>], iteration_bounds = array<i64: 1>, scalar_prefetch = 0 : i64, scratch_operands = 0 : i64, tpu.core_type = #tpu.core_type<tc>, window_params = [{pipeline_mode = #tpu.pipeline_mode<synchronous>, transform_indices = @transform_0, window_bounds = array<i64: 32, 16>}, {pipeline_mode = #tpu.pipeline_mode<synchronous>, transform_indices = @transform_1, window_bounds = array<i64: 32, 32>}, {pipeline_mode = #tpu.pipeline_mode<synchronous>, transform_indices = @transform_2, window_bounds = array<i64: 96, 32>}, {pipeline_mode = #tpu.pipeline_mode<synchronous>, transform_indices = @transform_3, window_bounds = array<i64: 4, 32>}, {pipeline_mode = #tpu.pipeline_mode<synchronous>, transform_indices = @transform_4, window_bounds = array<i64: 128, 32>}, {pipeline_mode = #tpu.pipeline_mode<synchronous>, transform_indices = @transform_5, window_bounds = array<i64: 4, 32>}, {pipeline_mode = #tpu.pipeline_mode<synchronous>, transform_indices = @transform_6, window_bounds = array<i64: 32, 32>}]} {
    %c0 = arith.constant 0 : index
    %c0_0 = arith.constant 0 : index
    %0 = vector.load %arg2[%c0, %c0_0] : memref<32x32xf32, #tpu.memory_space<vmem>>, vector<32x32xf32>
    %c0_1 = arith.constant 0 : index
    %c0_2 = arith.constant 0 : index
    %1 = vector.load %arg1[%c0_1, %c0_2] : memref<32x16xf32, #tpu.memory_space<vmem>>, vector<32x16xf32>
    %c0_3 = arith.constant 0 : index
    %c0_4 = arith.constant 0 : index
    %2 = vector.load %arg3[%c0_3, %c0_4] : memref<96x32xf32, #tpu.memory_space<vmem>>, vector<96x32xf32>
    %c0_5 = arith.constant 0 : index
    %c0_6 = arith.constant 0 : index
    %3 = vector.load %arg4[%c0_5, %c0_6] : memref<4x32xf32, #tpu.memory_space<vmem>>, vector<4x32xf32>
    %4 = vector.extract_strided_slice %2 {offsets = [0, 0], sizes = [16, 32], strides = [1, 1]} : vector<96x32xf32> to vector<16x32xf32>
    %5 = vector.extract_strided_slice %2 {offsets = [16, 0], sizes = [16, 32], strides = [1, 1]} : vector<96x32xf32> to vector<16x32xf32>
    %6 = vector.extract_strided_slice %2 {offsets = [32, 0], sizes = [32, 32], strides = [1, 1]} : vector<96x32xf32> to vector<32x32xf32>
    %7 = vector.extract_strided_slice %2 {offsets = [64, 0], sizes = [32, 32], strides = [1, 1]} : vector<96x32xf32> to vector<32x32xf32>
    %8 = vector.extract_strided_slice %3 {offsets = [0, 0], sizes = [1, 32], strides = [1, 1]} : vector<4x32xf32> to vector<1x32xf32>
    %9 = vector.extract_strided_slice %3 {offsets = [1, 0], sizes = [1, 32], strides = [1, 1]} : vector<4x32xf32> to vector<1x32xf32>
    %10 = vector.extract_strided_slice %3 {offsets = [2, 0], sizes = [1, 32], strides = [1, 1]} : vector<4x32xf32> to vector<1x32xf32>
    %11 = vector.extract_strided_slice %3 {offsets = [3, 0], sizes = [1, 32], strides = [1, 1]} : vector<4x32xf32> to vector<1x32xf32>
    %cst = arith.constant dense<0.000000e+00> : vector<32x32xf32>
    %12 = tpu.matmul %1, %4, %cst {dimension_numbers = #tpu.dot_dimension_numbers<[1], [0], [0], [1], [0, 0, 1, 1], [], []>} : vector<32x16xf32>, vector<16x32xf32>, vector<32x32xf32> -> vector<32x32xf32>
    %13 = vector.broadcast %8 : vector<1x32xf32> to vector<32x32xf32>
    %14 = arith.addf %12, %13 : vector<32x32xf32>
    %cst_7 = arith.constant 0.000000e+00 : f32
    %15 = vector.broadcast %cst_7 : f32 to vector<32x32xf32>
    %16 = arith.maximumf %14, %15 : vector<32x32xf32>
    %cst_8 = arith.constant dense<0.000000e+00> : vector<32x32xf32>
    %17 = tpu.matmul %1, %5, %cst_8 {dimension_numbers = #tpu.dot_dimension_numbers<[1], [0], [0], [1], [0, 0, 1, 1], [], []>} : vector<32x16xf32>, vector<16x32xf32>, vector<32x32xf32> -> vector<32x32xf32>
    %18 = vector.broadcast %9 : vector<1x32xf32> to vector<32x32xf32>
    %19 = arith.addf %17, %18 : vector<32x32xf32>
    %cst_9 = arith.constant 0.000000e+00 : f32
    %20 = vector.broadcast %cst_9 : f32 to vector<32x32xf32>
    %21 = arith.maximumf %19, %20 : vector<32x32xf32>
    %cst_10 = arith.constant dense<0.000000e+00> : vector<32x32xf32>
    %22 = tpu.matmul %16, %6, %cst_10 {dimension_numbers = #tpu.dot_dimension_numbers<[1], [0], [0], [1], [0, 0, 1, 1], [], []>} : vector<32x32xf32>, vector<32x32xf32>, vector<32x32xf32> -> vector<32x32xf32>
    %cst_11 = arith.constant 0.000000e+00 : f32
    %23 = vector.broadcast %cst_11 : f32 to vector<32x32xf32>
    %24 = arith.cmpf ogt, %22, %23 : vector<32x32xf32>
    %cst_12 = arith.constant 2.000000e-01 : f32
    %25 = vector.broadcast %cst_12 : f32 to vector<32x32xf32>
    %26 = arith.mulf %25, %22 : vector<32x32xf32>
    %27 = arith.select %24, %22, %26 : vector<32x32xi1>, vector<32x32xf32>
    %cst_13 = arith.constant dense<0.000000e+00> : vector<32x32xf32>
    %28 = tpu.matmul %16, %7, %cst_13 {dimension_numbers = #tpu.dot_dimension_numbers<[1], [0], [0], [1], [0, 0, 1, 1], [], []>} : vector<32x32xf32>, vector<32x32xf32>, vector<32x32xf32> -> vector<32x32xf32>
    %cst_14 = arith.constant 0.000000e+00 : f32
    %29 = vector.broadcast %cst_14 : f32 to vector<32x32xf32>
    %30 = arith.cmpf ogt, %28, %29 : vector<32x32xf32>
    %cst_15 = arith.constant 2.000000e-01 : f32
    %31 = vector.broadcast %cst_15 : f32 to vector<32x32xf32>
    %32 = arith.mulf %31, %28 : vector<32x32xf32>
    %33 = arith.select %30, %28, %32 : vector<32x32xi1>, vector<32x32xf32>
    %cst_16 = arith.constant dense<0.000000e+00> : vector<32x32xf32>
    %34 = tpu.matmul %0, %21, %cst_16 {dimension_numbers = #tpu.dot_dimension_numbers<[1], [0], [0], [1], [0, 0, 1, 1], [], []>} : vector<32x32xf32>, vector<32x32xf32>, vector<32x32xf32> -> vector<32x32xf32>
    %35 = arith.mulf %33, %21 : vector<32x32xf32>
    %cst_17 = arith.constant dense<0.000000e+00> : vector<32x32xf32>
    %36 = tpu.matmul %0, %35, %cst_17 {dimension_numbers = #tpu.dot_dimension_numbers<[1], [0], [0], [1], [0, 0, 1, 1], [], []>} : vector<32x32xf32>, vector<32x32xf32>, vector<32x32xf32> -> vector<32x32xf32>
    %37 = arith.mulf %27, %34 : vector<32x32xf32>
    %38 = arith.addf %37, %36 : vector<32x32xf32>
    %cst_18 = arith.constant dense<0.000000e+00> : vector<32xf32>
    %39 = vector.multi_reduction <add>, %38, %cst_18 [0] : vector<32x32xf32> to vector<32xf32>
    %40 = vector.shape_cast %39 : vector<32xf32> to vector<1x32xf32>
    %cst_19 = arith.constant 3.200000e+01 : f32
    %41 = vector.broadcast %cst_19 : f32 to vector<1x32xf32>
    %42 = arith.divf %40, %41 : vector<1x32xf32>
    %43 = arith.mulf %38, %38 : vector<32x32xf32>
    %cst_20 = arith.constant dense<0.000000e+00> : vector<32xf32>
    %44 = vector.multi_reduction <add>, %43, %cst_20 [0] : vector<32x32xf32> to vector<32xf32>
    %45 = vector.shape_cast %44 : vector<32xf32> to vector<1x32xf32>
    %cst_21 = arith.constant 3.200000e+01 : f32
    %46 = vector.broadcast %cst_21 : f32 to vector<1x32xf32>
    %47 = arith.divf %45, %46 : vector<1x32xf32>
    %48 = arith.mulf %42, %42 : vector<1x32xf32>
    %49 = arith.subf %47, %48 : vector<1x32xf32>
    %cst_22 = arith.constant 0.000000e+00 : f32
    %50 = vector.broadcast %cst_22 : f32 to vector<1x32xf32>
    %51 = arith.maximumf %49, %50 : vector<1x32xf32>
    %52 = vector.broadcast %42 : vector<1x32xf32> to vector<32x32xf32>
    %53 = arith.subf %38, %52 : vector<32x32xf32>
    %cst_23 = arith.constant 9.99999971E-10 : f32
    %54 = vector.broadcast %cst_23 : f32 to vector<1x32xf32>
    %55 = arith.addf %51, %54 : vector<1x32xf32>
    %56 = math.rsqrt %55 : vector<1x32xf32>
    %57 = vector.broadcast %56 : vector<1x32xf32> to vector<32x32xf32>
    %58 = arith.mulf %53, %57 : vector<32x32xf32>
    %59 = vector.broadcast %10 : vector<1x32xf32> to vector<32x32xf32>
    %60 = arith.mulf %58, %59 : vector<32x32xf32>
    %61 = vector.broadcast %11 : vector<1x32xf32> to vector<32x32xf32>
    %62 = arith.addf %60, %61 : vector<32x32xf32>
    %c0_24 = arith.constant 0 : index
    %c0_25 = arith.constant 0 : index
    %63 = vector.load %arg5[%c0_24, %c0_25] : memref<128x32xf32, #tpu.memory_space<vmem>>, vector<128x32xf32>
    %c0_26 = arith.constant 0 : index
    %c0_27 = arith.constant 0 : index
    %64 = vector.load %arg6[%c0_26, %c0_27] : memref<4x32xf32, #tpu.memory_space<vmem>>, vector<4x32xf32>
    %65 = vector.extract_strided_slice %63 {offsets = [0, 0], sizes = [32, 32], strides = [1, 1]} : vector<128x32xf32> to vector<32x32xf32>
    %66 = vector.extract_strided_slice %63 {offsets = [32, 0], sizes = [32, 32], strides = [1, 1]} : vector<128x32xf32> to vector<32x32xf32>
    %67 = vector.extract_strided_slice %63 {offsets = [64, 0], sizes = [32, 32], strides = [1, 1]} : vector<128x32xf32> to vector<32x32xf32>
    %68 = vector.extract_strided_slice %63 {offsets = [96, 0], sizes = [32, 32], strides = [1, 1]} : vector<128x32xf32> to vector<32x32xf32>
    %69 = vector.extract_strided_slice %64 {offsets = [0, 0], sizes = [1, 32], strides = [1, 1]} : vector<4x32xf32> to vector<1x32xf32>
    %70 = vector.extract_strided_slice %64 {offsets = [1, 0], sizes = [1, 32], strides = [1, 1]} : vector<4x32xf32> to vector<1x32xf32>
    %71 = vector.extract_strided_slice %64 {offsets = [2, 0], sizes = [1, 32], strides = [1, 1]} : vector<4x32xf32> to vector<1x32xf32>
    %72 = vector.extract_strided_slice %64 {offsets = [3, 0], sizes = [1, 32], strides = [1, 1]} : vector<4x32xf32> to vector<1x32xf32>
    %cst_28 = arith.constant dense<0.000000e+00> : vector<32x32xf32>
    %73 = tpu.matmul %62, %65, %cst_28 {dimension_numbers = #tpu.dot_dimension_numbers<[1], [0], [0], [1], [0, 0, 1, 1], [], []>} : vector<32x32xf32>, vector<32x32xf32>, vector<32x32xf32> -> vector<32x32xf32>
    %74 = vector.broadcast %69 : vector<1x32xf32> to vector<32x32xf32>
    %75 = arith.addf %73, %74 : vector<32x32xf32>
    %cst_29 = arith.constant 0.000000e+00 : f32
    %76 = vector.broadcast %cst_29 : f32 to vector<32x32xf32>
    %77 = arith.maximumf %75, %76 : vector<32x32xf32>
    %cst_30 = arith.constant dense<0.000000e+00> : vector<32x32xf32>
    %78 = tpu.matmul %62, %66, %cst_30 {dimension_numbers = #tpu.dot_dimension_numbers<[1], [0], [0], [1], [0, 0, 1, 1], [], []>} : vector<32x32xf32>, vector<32x32xf32>, vector<32x32xf32> -> vector<32x32xf32>
    %79 = vector.broadcast %70 : vector<1x32xf32> to vector<32x32xf32>
    %80 = arith.addf %78, %79 : vector<32x32xf32>
    %cst_31 = arith.constant 0.000000e+00 : f32
    %81 = vector.broadcast %cst_31 : f32 to vector<32x32xf32>
    %82 = arith.maximumf %80, %81 : vector<32x32xf32>
    %cst_32 = arith.constant dense<0.000000e+00> : vector<32x32xf32>
    %83 = tpu.matmul %77, %67, %cst_32 {dimension_numbers = #tpu.dot_dimension_numbers<[1], [0], [0], [1], [0, 0, 1, 1], [], []>} : vector<32x32xf32>, vector<32x32xf32>, vector<32x32xf32> -> vector<32x32xf32>
    %cst_33 = arith.constant 0.000000e+00 : f32
    %84 = vector.broadcast %cst_33 : f32 to vector<32x32xf32>
    %85 = arith.cmpf ogt, %83, %84 : vector<32x32xf32>
    %cst_34 = arith.constant 2.000000e-01 : f32
    %86 = vector.broadcast %cst_34 : f32 to vector<32x32xf32>
    %87 = arith.mulf %86, %83 : vector<32x32xf32>
    %88 = arith.select %85, %83, %87 : vector<32x32xi1>, vector<32x32xf32>
    %cst_35 = arith.constant dense<0.000000e+00> : vector<32x32xf32>
    %89 = tpu.matmul %77, %68, %cst_35 {dimension_numbers = #tpu.dot_dimension_numbers<[1], [0], [0], [1], [0, 0, 1, 1], [], []>} : vector<32x32xf32>, vector<32x32xf32>, vector<32x32xf32> -> vector<32x32xf32>
    %cst_36 = arith.constant 0.000000e+00 : f32
    %90 = vector.broadcast %cst_36 : f32 to vector<32x32xf32>
    %91 = arith.cmpf ogt, %89, %90 : vector<32x32xf32>
    %cst_37 = arith.constant 2.000000e-01 : f32
    %92 = vector.broadcast %cst_37 : f32 to vector<32x32xf32>
    %93 = arith.mulf %92, %89 : vector<32x32xf32>
    %94 = arith.select %91, %89, %93 : vector<32x32xi1>, vector<32x32xf32>
    %cst_38 = arith.constant dense<0.000000e+00> : vector<32x32xf32>
    %95 = tpu.matmul %0, %82, %cst_38 {dimension_numbers = #tpu.dot_dimension_numbers<[1], [0], [0], [1], [0, 0, 1, 1], [], []>} : vector<32x32xf32>, vector<32x32xf32>, vector<32x32xf32> -> vector<32x32xf32>
    %96 = arith.mulf %94, %82 : vector<32x32xf32>
    %cst_39 = arith.constant dense<0.000000e+00> : vector<32x32xf32>
    %97 = tpu.matmul %0, %96, %cst_39 {dimension_numbers = #tpu.dot_dimension_numbers<[1], [0], [0], [1], [0, 0, 1, 1], [], []>} : vector<32x32xf32>, vector<32x32xf32>, vector<32x32xf32> -> vector<32x32xf32>
    %98 = arith.mulf %88, %95 : vector<32x32xf32>
    %99 = arith.addf %98, %97 : vector<32x32xf32>
    %cst_40 = arith.constant dense<0.000000e+00> : vector<32xf32>
    %100 = vector.multi_reduction <add>, %99, %cst_40 [0] : vector<32x32xf32> to vector<32xf32>
    %101 = vector.shape_cast %100 : vector<32xf32> to vector<1x32xf32>
    %cst_41 = arith.constant 3.200000e+01 : f32
    %102 = vector.broadcast %cst_41 : f32 to vector<1x32xf32>
    %103 = arith.divf %101, %102 : vector<1x32xf32>
    %104 = arith.mulf %99, %99 : vector<32x32xf32>
    %cst_42 = arith.constant dense<0.000000e+00> : vector<32xf32>
    %105 = vector.multi_reduction <add>, %104, %cst_42 [0] : vector<32x32xf32> to vector<32xf32>
    %106 = vector.shape_cast %105 : vector<32xf32> to vector<1x32xf32>
    %cst_43 = arith.constant 3.200000e+01 : f32
    %107 = vector.broadcast %cst_43 : f32 to vector<1x32xf32>
    %108 = arith.divf %106, %107 : vector<1x32xf32>
    %109 = arith.mulf %103, %103 : vector<1x32xf32>
    %110 = arith.subf %108, %109 : vector<1x32xf32>
    %cst_44 = arith.constant 0.000000e+00 : f32
    %111 = vector.broadcast %cst_44 : f32 to vector<1x32xf32>
    %112 = arith.maximumf %110, %111 : vector<1x32xf32>
    %113 = vector.broadcast %103 : vector<1x32xf32> to vector<32x32xf32>
    %114 = arith.subf %99, %113 : vector<32x32xf32>
    %cst_45 = arith.constant 9.99999971E-10 : f32
    %115 = vector.broadcast %cst_45 : f32 to vector<1x32xf32>
    %116 = arith.addf %112, %115 : vector<1x32xf32>
    %117 = math.rsqrt %116 : vector<1x32xf32>
    %118 = vector.broadcast %117 : vector<1x32xf32> to vector<32x32xf32>
    %119 = arith.mulf %114, %118 : vector<32x32xf32>
    %120 = vector.broadcast %71 : vector<1x32xf32> to vector<32x32xf32>
    %121 = arith.mulf %119, %120 : vector<32x32xf32>
    %122 = vector.broadcast %72 : vector<1x32xf32> to vector<32x32xf32>
    %123 = arith.addf %121, %122 : vector<32x32xf32>
    %c0_46 = arith.constant 0 : index
    %c0_47 = arith.constant 0 : index
    %124 = vector.load %arg7[%c0_46, %c0_47] : memref<32x32xf32, #tpu.memory_space<vmem>>, vector<32x32xf32>
    tpu.vector_store %arg7[%c0_46, %c0_47], %123 {strides = array<i32>} : memref<32x32xf32, #tpu.memory_space<vmem>>, vector<32x32xf32>,
    return
  }
  func.func @transform_0(%arg0: i32) -> (i32, i32) {
    %c0_i32 = arith.constant 0 : i32
    %c0_i32_0 = arith.constant 0 : i32
    %c0_i32_1 = arith.constant 0 : i32
    return %c0_i32, %c0_i32_0 : i32, i32
  }
  func.func @transform_1(%arg0: i32) -> (i32, i32) {
    %c0_i32 = arith.constant 0 : i32
    %c0_i32_0 = arith.constant 0 : i32
    %c0_i32_1 = arith.constant 0 : i32
    return %c0_i32, %c0_i32_0 : i32, i32
  }
  func.func @transform_2(%arg0: i32) -> (i32, i32) {
    %c0_i32 = arith.constant 0 : i32
    %c0_i32_0 = arith.constant 0 : i32
    %c0_i32_1 = arith.constant 0 : i32
    return %c0_i32, %c0_i32_0 : i32, i32
  }
  func.func @transform_3(%arg0: i32) -> (i32, i32) {
    %c0_i32 = arith.constant 0 : i32
    %c0_i32_0 = arith.constant 0 : i32
    %c0_i32_1 = arith.constant 0 : i32
    return %c0_i32, %c0_i32_0 : i32, i32
  }
  func.func @transform_4(%arg0: i32) -> (i32, i32) {
    %c0_i32 = arith.constant 0 : i32
    %c0_i32_0 = arith.constant 0 : i32
    %c0_i32_1 = arith.constant 0 : i32
    return %c0_i32, %c0_i32_0 : i32, i32
  }
  func.func @transform_5(%arg0: i32) -> (i32, i32) {
    %c0_i32 = arith.constant 0 : i32
    %c0_i32_0 = arith.constant 0 : i32
    %c0_i32_1 = arith.constant 0 : i32
    return %c0_i32, %c0_i32_0 : i32, i32
  }
  func.func @transform_6(%arg0: i32) -> (i32, i32) {
    %c0_i32 = arith.constant 0 : i32
    %c0_i32_0 = arith.constant 0 : i32
    %c0_i32_1 = arith.constant 0 : i32
    return %c0_i32, %c0_i32_0 : i32, i32
  }
}

</mosaic_0001>

<llo_original>
// kernel: _lambda_.1
$region0: #{_lambda_.1}
  #allocation0 [shape = 'u32[]', space=smem, size = 0x4, offset = 0x4, fixed_abs, tag = 'smem constant byte address 0x4 - core index']
  #allocation1 [shape = 'u32[72,128]{1,0:T(1,128)}', space=vmem, size = 0x9000, scoped, tag = 'internal scratch']
  %s0 = inlined_call_operand.vmem [shape: f32[32,16], index: 0, kind: input, shape index: {}]
  %s1 = inlined_call_operand.vmem [shape: f32[32,32], index: 1, kind: input, shape index: {}]
  %s2 = inlined_call_operand.vmem [shape: f32[96,32], index: 2, kind: input, shape index: {}]
  %s3 = inlined_call_operand.vmem [shape: f32[4,32], index: 3, kind: input, shape index: {}, may-alias: {3,5}]
  %s4 = inlined_call_operand.vmem [shape: f32[128,32], index: 4, kind: input, shape index: {}]
  %s5 = inlined_call_operand.vmem [shape: f32[4,32], index: 5, kind: input, shape index: {}, may-alias: {3,5}]
  %s6 = inlined_call_operand.hbm [shape: f32[32,32], index: 6, kind: output, shape index: {}]
  %s7 = sld [smem:[#allocation0]]
  $region34: #{_lambda_.1} parent=0
    _
  %s9 = ssub.s32 1, %s7
  %s10 = scalar_select 0, %s9, %s7
  $region1: #{_lambda_.1} parent=0
    #allocation2 [shape = 'u8[16384]{0}', space=vmem, size = 0x4000, scoped, tag = 'output window, operand 0, single buffered']
    #allocation3 [shape = 's32[1]{0}', space=sflag, size = 0x4, scoped, tag = 'scoped memory for _lambda_.1']
    %11 = vsyncpa [#allocation3], 0
    // Predicated region
    $region2: #{_lambda_.1} parent=1 // pred_check
      _
    $region3: #{_lambda_.1} parent=1 // pred_check_branch
      %13 = sbr.rel (0) target = $region5
    $region4: #{_lambda_.1} parent=1 // pred_region
      _
    $region5: #{_lambda_.1} parent=1 // pred_fallthru
      _
    // Predicated region
    $region6: #{_lambda_.1} parent=1 // pred_check
      _
    $region7: #{_lambda_.1} parent=1 // pred_check_branch
      %15 = sbr.rel (0) target = $region9
    $region8: #{_lambda_.1} parent=1 // pred_region
      _
    $region9: #{_lambda_.1} parent=1 // pred_fallthru
      _
    // Predicated region
    $region10: #{_lambda_.1} parent=1 // pred_check
      _
    $region11: #{_lambda_.1} parent=1 // pred_check_branch
      %17 = sbr.rel (0) target = $region13
    $region12: #{_lambda_.1} parent=1 // pred_region
      _
    $region13: #{_lambda_.1} parent=1 // pred_fallthru
      _
    // Predicated region
    $region14: #{_lambda_.1} parent=1 // pred_check
      _
    $region15: #{_lambda_.1} parent=1 // pred_check_branch
      %19 = sbr.rel (0) target = $region17
    $region16: #{_lambda_.1} parent=1 // pred_region
      _
    $region17: #{_lambda_.1} parent=1 // pred_fallthru
      _
    // Predicated region
    $region18: #{_lambda_.1} parent=1 // pred_check
      _
    $region19: #{_lambda_.1} parent=1 // pred_check_branch
      %21 = sbr.rel (0) target = $region21
    $region20: #{_lambda_.1} parent=1 // pred_region
      _
    $region21: #{_lambda_.1} parent=1 // pred_fallthru
      _
    // Predicated region
    $region22: #{_lambda_.1} parent=1 // pred_check
      _
    $region23: #{_lambda_.1} parent=1 // pred_check_branch
      %23 = sbr.rel (0) target = $region25
    $region24: #{_lambda_.1} parent=1 // pred_region
      _
    $region25: #{_lambda_.1} parent=1 // pred_fallthru
      _
    %v24 = vld [vmem:[%s1] sm:$0xff]
    %v25 = vld [vmem:[%s1 + $0x8] sm:$0xff]
    %v26 = vld [vmem:[%s1 + $0x10] sm:$0xff]
    %v27 = vld [vmem:[%s1 + $0x18] sm:$0xff]
    %v28 = vld [vmem:[%s0] sm:$0xff]
    %v29 = vld [vmem:[%s0 + $0x8] sm:$0xff]
    %v30 = vld [vmem:[%s0 + $0x10] sm:$0xff]
    %v31 = vld [vmem:[%s0 + $0x18] sm:$0xff]
    %v32 = vld [vmem:[%s2] sm:$0xff]
    %v33 = vld [vmem:[%s2 + $0x8] sm:$0xff]
    %v34 = vld [vmem:[%s2 + $0x10] sm:$0xff]
    %v35 = vld [vmem:[%s2 + $0x18] sm:$0xff]
    %v36 = vld [vmem:[%s2 + $0x20] sm:$0xff]
    %v37 = vld [vmem:[%s2 + $0x28] sm:$0xff]
    %v38 = vld [vmem:[%s2 + $0x30] sm:$0xff]
    %v39 = vld [vmem:[%s2 + $0x38] sm:$0xff]
    %v40 = vld [vmem:[%s2 + $0x40] sm:$0xff]
    %v41 = vld [vmem:[%s2 + $0x48] sm:$0xff]
    %v42 = vld [vmem:[%s2 + $0x50] sm:$0xff]
    %v43 = vld [vmem:[%s2 + $0x58] sm:$0xff]
    %v44 = vld [vmem:[%s3] sm:$0xf]
    %v45 = vperm.slane %v44, 0
    %vm46 = vcmask 130048
    %v48 = vsel %vm46, %v28, 0
    %v51 = vsel %vm46, %v29, 0
    %v54 = vsel %vm46, %v30, 0
    %v57 = vsel %vm46, %v31, 0
    %59 = vmatpush.msra.mxu0 0.0
    %60 = vmatpush.msra.mxu0 0.0
    %61 = vmatpush.msra.mxu0 0.0
    %62 = vmatpush.msra.mxu0 0.0
    %63 = vmatpush.msra.mxu0 0.0
    %64 = vmatpush.msra.mxu0 0.0
    %65 = vmatpush.msra.mxu0 0.0
    %66 = vmatpush.msra.mxu0 0.0
    %67 = vmatpush.msra.mxu0 0.0
    %68 = vmatpush.msra.mxu0 0.0
    %69 = vmatpush.msra.mxu0 0.0
    %70 = vmatpush.msra.mxu0 0.0
    %71 = vmatpush.msra.mxu0 0.0
    %72 = vmatpush.msra.mxu0 0.0
    %73 = vmatpush.msra.mxu0 %v33
    %74 = vmatpush.msra.mxu0 %v32
    %75 = vmatmul.f32.gmra.mxu0 %v48
    %v76 = vpop.f32.mrf.mxu0
    %v77 = vadd.f32 %v45, %v76
    %78 = vmatmul.f32.gmra.mxu0 %v51
    %v79 = vpop.f32.mrf.mxu0
    %v80 = vadd.f32 %v45, %v79
    %81 = vmatmul.f32.gmra.mxu0 %v54
    %v82 = vpop.f32.mrf.mxu0
    %v83 = vadd.f32 %v45, %v82
    %84 = vmatmul.f32.gmra.mxu0 %v57
    %v85 = vpop.f32.mrf.mxu0
    %v86 = vadd.f32 %v45, %v85
    %87 = vdwg.mxu0
    %v88 = vmax.f32 %v77, 0.0
    %v89 = vmax.f32 %v80, 0.0
    %v90 = vmax.f32 %v83, 0.0
    %v91 = vmax.f32 %v86, 0.0
    %v92 = vperm.slane %v44, 1
    %93 = vmatpush.msra.mxu0 0.0
    %94 = vmatpush.msra.mxu0 0.0
    %95 = vmatpush.msra.mxu0 0.0
    %96 = vmatpush.msra.mxu0 0.0
    %97 = vmatpush.msra.mxu0 0.0
    %98 = vmatpush.msra.mxu0 0.0
    %99 = vmatpush.msra.mxu0 0.0
    %100 = vmatpush.msra.mxu0 0.0
    %101 = vmatpush.msra.mxu0 0.0
    %102 = vmatpush.msra.mxu0 0.0
    %103 = vmatpush.msra.mxu0 0.0
    %104 = vmatpush.msra.mxu0 0.0
    %105 = vmatpush.msra.mxu0 0.0
    %106 = vmatpush.msra.mxu0 0.0
    %107 = vmatpush.msra.mxu0 %v35
    %108 = vmatpush.msra.mxu0 %v34
    %109 = vmatmul.f32.gmra.mxu0 %v48
    %v110 = vpop.f32.mrf.mxu0
    %v111 = vadd.f32 %v92, %v110
    %112 = vmatmul.f32.gmra.mxu0 %v51
    %v113 = vpop.f32.mrf.mxu0
    %v114 = vadd.f32 %v92, %v113
    %115 = vmatmul.f32.gmra.mxu0 %v54
    %v116 = vpop.f32.mrf.mxu0
    %v117 = vadd.f32 %v92, %v116
    %118 = vmatmul.f32.gmra.mxu0 %v57
    %v119 = vpop.f32.mrf.mxu0
    %v120 = vadd.f32 %v92, %v119
    %121 = vdwg.mxu0
    %v122 = vmax.f32 %v111, 0.0
    %v123 = vmax.f32 %v114, 0.0
    %v124 = vmax.f32 %v117, 0.0
    %v125 = vmax.f32 %v120, 0.0
    %vm126 = vcmask 261120
    %v128 = vsel %vm126, %v88, 0
    %v131 = vsel %vm126, %v89, 0
    %v134 = vsel %vm126, %v90, 0
    %v137 = vsel %vm126, %v91, 0
    %139 = vmatpush.msra.mxu0 0.0
    %140 = vmatpush.msra.mxu0 0.0
    %141 = vmatpush.msra.mxu0 0.0
    %142 = vmatpush.msra.mxu0 0.0
    %143 = vmatpush.msra.mxu0 0.0
    %144 = vmatpush.msra.mxu0 0.0
    %145 = vmatpush.msra.mxu0 0.0
    %146 = vmatpush.msra.mxu0 0.0
    %147 = vmatpush.msra.mxu0 0.0
    %148 = vmatpush.msra.mxu0 0.0
    %149 = vmatpush.msra.mxu0 0.0
    %150 = vmatpush.msra.mxu0 0.0
    %151 = vmatpush.msra.mxu0 %v39
    %152 = vmatpush.msra.mxu0 %v38
    %153 = vmatpush.msra.mxu0 %v37
    %154 = vmatpush.msra.mxu0 %v36
    %155 = vmatmul.f32.gmra.mxu0 %v128
    %v156 = vpop.f32.mrf.mxu0
    %v157 = vadd.f32 0.0, %v156
    %158 = vmatmul.f32.gmra.mxu0 %v131
    %v159 = vpop.f32.mrf.mxu0
    %v160 = vadd.f32 0.0, %v159
    %161 = vmatmul.f32.gmra.mxu0 %v134
    %v162 = vpop.f32.mrf.mxu0
    %v163 = vadd.f32 0.0, %v162
    %164 = vmatmul.f32.gmra.mxu0 %v137
    %v165 = vpop.f32.mrf.mxu0
    %v166 = vadd.f32 0.0, %v165
    %167 = vdwg.mxu0
    %vm168 = vcmp.gt.f32.partialorder %v157, 0.0
    %vm169 = vcmp.gt.f32.partialorder %v160, 0.0
    %vm170 = vcmp.gt.f32.partialorder %v163, 0.0
    %vm171 = vcmp.gt.f32.partialorder %v166, 0.0
    %v172 = vmul.f32 %v157, 0.2
    %v173 = vmul.f32 %v160, 0.2
    %v174 = vmul.f32 %v163, 0.2
    %v175 = vmul.f32 %v166, 0.2
    %v176 = vsel %vm168, %v157, %v172
    %v177 = vsel %vm169, %v160, %v173
    %v178 = vsel %vm170, %v163, %v174
    %v179 = vsel %vm171, %v166, %v175
    %180 = vmatpush.msra.mxu0 0.0
    %181 = vmatpush.msra.mxu0 0.0
    %182 = vmatpush.msra.mxu0 0.0
    %183 = vmatpush.msra.mxu0 0.0
    %184 = vmatpush.msra.mxu0 0.0
    %185 = vmatpush.msra.mxu0 0.0
    %186 = vmatpush.msra.mxu0 0.0
    %187 = vmatpush.msra.mxu0 0.0
    %188 = vmatpush.msra.mxu0 0.0
    %189 = vmatpush.msra.mxu0 0.0
    %190 = vmatpush.msra.mxu0 0.0
    %191 = vmatpush.msra.mxu0 0.0
    %192 = vmatpush.msra.mxu0 %v43
    %193 = vmatpush.msra.mxu0 %v42
    %194 = vmatpush.msra.mxu0 %v41
    %195 = vmatpush.msra.mxu0 %v40
    %196 = vmatmul.f32.gmra.mxu0 %v128
    %v197 = vpop.f32.mrf.mxu0
    %v198 = vadd.f32 0.0, %v197
    %199 = vmatmul.f32.gmra.mxu0 %v131
    %v200 = vpop.f32.mrf.mxu0
    %v201 = vadd.f32 0.0, %v200
    %202 = vmatmul.f32.gmra.mxu0 %v134
    %v203 = vpop.f32.mrf.mxu0
    %v204 = vadd.f32 0.0, %v203
    %205 = vmatmul.f32.gmra.mxu0 %v137
    %v206 = vpop.f32.mrf.mxu0
    %v207 = vadd.f32 0.0, %v206
    %208 = vdwg.mxu0
    %vm209 = vcmp.gt.f32.partialorder %v198, 0.0
    %vm210 = vcmp.gt.f32.partialorder %v201, 0.0
    %vm211 = vcmp.gt.f32.partialorder %v204, 0.0
    %vm212 = vcmp.gt.f32.partialorder %v207, 0.0
    %v213 = vmul.f32 %v198, 0.2
    %v214 = vmul.f32 %v201, 0.2
    %v215 = vmul.f32 %v204, 0.2
    %v216 = vmul.f32 %v207, 0.2
    %v217 = vsel %vm209, %v198, %v213
    %v218 = vsel %vm210, %v201, %v214
    %v219 = vsel %vm211, %v204, %v215
    %v220 = vsel %vm212, %v207, %v216
    %v222 = vsel %vm126, %v24, 0
    %v225 = vsel %vm126, %v25, 0
    %v228 = vsel %vm126, %v26, 0
    %v231 = vsel %vm126, %v27, 0
    %233 = vmatpush.msra.mxu0 0.0
    %234 = vmatpush.msra.mxu0 0.0
    %235 = vmatpush.msra.mxu0 0.0
    %236 = vmatpush.msra.mxu0 0.0
    %237 = vmatpush.msra.mxu0 0.0
    %238 = vmatpush.msra.mxu0 0.0
    %239 = vmatpush.msra.mxu0 0.0
    %240 = vmatpush.msra.mxu0 0.0
    %241 = vmatpush.msra.mxu0 0.0
    %242 = vmatpush.msra.mxu0 0.0
    %243 = vmatpush.msra.mxu0 0.0
    %244 = vmatpush.msra.mxu0 0.0
    %245 = vmatpush.msra.mxu0 %v125
    %246 = vmatpush.msra.mxu0 %v124
    %247 = vmatpush.msra.mxu0 %v123
    %248 = vmatpush.msra.mxu0 %v122
    %249 = vmatmul.f32.gmra.mxu0 %v222
    %v250 = vpop.f32.mrf.mxu0
    %v251 = vadd.f32 0.0, %v250
    %252 = vmatmul.f32.gmra.mxu0 %v225
    %v253 = vpop.f32.mrf.mxu0
    %v254 = vadd.f32 0.0, %v253
    %255 = vmatmul.f32.gmra.mxu0 %v228
    %v256 = vpop.f32.mrf.mxu0
    %v257 = vadd.f32 0.0, %v256
    %258 = vmatmul.f32.gmra.mxu0 %v231
    %v259 = vpop.f32.mrf.mxu0
    %v260 = vadd.f32 0.0, %v259
    %261 = vdwg.mxu0
    %v262 = vmul.f32 %v217, %v122
    %v263 = vmul.f32 %v218, %v123
    %v264 = vmul.f32 %v219, %v124
    %v265 = vmul.f32 %v220, %v125
    %266 = vmatpush.msra.mxu0 0.0
    %267 = vmatpush.msra.mxu0 0.0
    %268 = vmatpush.msra.mxu0 0.0
    %269 = vmatpush.msra.mxu0 0.0
    %270 = vmatpush.msra.mxu0 0.0
    %271 = vmatpush.msra.mxu0 0.0
    %272 = vmatpush.msra.mxu0 0.0
    %273 = vmatpush.msra.mxu0 0.0
    %274 = vmatpush.msra.mxu0 0.0
    %275 = vmatpush.msra.mxu0 0.0
    %276 = vmatpush.msra.mxu0 0.0
    %277 = vmatpush.msra.mxu0 0.0
    %278 = vmatpush.msra.mxu0 %v265
    %279 = vmatpush.msra.mxu0 %v264
    %280 = vmatpush.msra.mxu0 %v263
    %281 = vmatpush.msra.mxu0 %v262
    %282 = vmatmul.f32.gmra.mxu0 %v222
    %v283 = vpop.f32.mrf.mxu0
    %v284 = vadd.f32 0.0, %v283
    %285 = vmatmul.f32.gmra.mxu0 %v225
    %v286 = vpop.f32.mrf.mxu0
    %v287 = vadd.f32 0.0, %v286
    %288 = vmatmul.f32.gmra.mxu0 %v228
    %v289 = vpop.f32.mrf.mxu0
    %v290 = vadd.f32 0.0, %v289
    %291 = vmatmul.f32.gmra.mxu0 %v231
    %v292 = vpop.f32.mrf.mxu0
    %v293 = vadd.f32 0.0, %v292
    %294 = vdwg.mxu0
    %v295 = vmul.f32 %v176, %v251
    %v296 = vmul.f32 %v177, %v254
    %v297 = vmul.f32 %v178, %v257
    %v298 = vmul.f32 %v179, %v260
    %v299 = vadd.f32 %v295, %v284
    %v300 = vadd.f32 %v296, %v287
    %v301 = vadd.f32 %v297, %v290
    %v302 = vadd.f32 %v298, %v293
    %v303 = vsel %vm126, %v299, 0.0
    %v304 = vsel %vm126, %v300, 0.0
    %v305 = vadd.f32 %v303, %v304
    %v306 = vsel %vm126, %v301, 0.0
    %v307 = vadd.f32 %v305, %v306
    %v308 = vsel %vm126, %v302, 0.0
    %v309 = vadd.f32 %v307, %v308
    %v310 = vrot.slane %v309, 4
    %v311 = vadd.f32 %v309, %v310
    %v312 = vrot.slane %v311, 2
    %v313 = vadd.f32 %v311, %v312
    %v314 = vrot.slane %v313, 1
    %v315 = vadd.f32 %v313, %v314
    %v316 = vrcp.pop 32.0
    %v317 = vmul.f32 32.0, %v316
    %v318 = vsub.f32 1.0, %v317
    %v319 = vmul.f32 %v316, %v318
    %v320 = vadd.f32 %v316, %v319
    %vm321 = vweird.f32 %v316
    %v322 = vsel %vm321, %v316, %v320
    %v323 = vmul.f32 %v315, %v322
    %v324 = vmul.f32 %v299, %v299
    %v325 = vmul.f32 %v300, %v300
    %v326 = vmul.f32 %v301, %v301
    %v327 = vmul.f32 %v302, %v302
    %v328 = vsel %vm126, %v324, 0.0
    %v329 = vsel %vm126, %v325, 0.0
    %v330 = vadd.f32 %v328, %v329
    %v331 = vsel %vm126, %v326, 0.0
    %v332 = vadd.f32 %v330, %v331
    %v333 = vsel %vm126, %v327, 0.0
    %v334 = vadd.f32 %v332, %v333
    %v335 = vrot.slane %v334, 4
    %v336 = vadd.f32 %v334, %v335
    %v337 = vrot.slane %v336, 2
    %v338 = vadd.f32 %v336, %v337
    %v339 = vrot.slane %v338, 1
    %v340 = vadd.f32 %v338, %v339
    %v341 = vmul.f32 %v340, %v322
    %v342 = vmul.f32 %v323, %v323
    %v343 = vsub.f32 %v341, %v342
    %v344 = vmax.f32 %v343, 0.0
    %v345 = vsub.f32 %v299, %v323
    %v346 = vsub.f32 %v300, %v323
    %v347 = vsub.f32 %v301, %v323
    %v348 = vsub.f32 %v302, %v323
    %v349 = vadd.f32 %v344, 1e-09
    %v350 = vrsqrt.pop %v349
    %v351 = vmul.f32 %v350, %v349
    %v352 = vmul.f32 %v351, %v350
    %v353 = vmul.f32 0.5, %v352
    %v354 = vsub.f32 1.5, %v353
    %v355 = vmul.f32 %v350, %v354
    %vm356 = vweird.f32 %v349
    %vm357 = vweird.f32 %v350
    %vm358 = vmor %vm356, %vm357
    %v359 = vsel %vm358, %v350, %v355
    %v360 = vmul.f32 %v345, %v359
    %v361 = vmul.f32 %v346, %v359
    %v362 = vmul.f32 %v347, %v359
    %v363 = vmul.f32 %v348, %v359
    %v364 = vperm.slane %v44, 2
    %v365 = vmul.f32 %v360, %v364
    %v366 = vmul.f32 %v361, %v364
    %v367 = vmul.f32 %v362, %v364
    %v368 = vmul.f32 %v363, %v364
    %v369 = vperm.slane %v44, 3
    %v370 = vadd.f32 %v365, %v369
    %v371 = vadd.f32 %v366, %v369
    %v372 = vadd.f32 %v367, %v369
    %v373 = vadd.f32 %v368, %v369
    %v374 = vld [vmem:[%s4] sm:$0xff]
    %v375 = vld [vmem:[%s4 + $0x8] sm:$0xff]
    %v376 = vld [vmem:[%s4 + $0x10] sm:$0xff]
    %v377 = vld [vmem:[%s4 + $0x18] sm:$0xff]
    %v378 = vld [vmem:[%s4 + $0x20] sm:$0xff]
    %v379 = vld [vmem:[%s4 + $0x28] sm:$0xff]
    %v380 = vld [vmem:[%s4 + $0x30] sm:$0xff]
    %v381 = vld [vmem:[%s4 + $0x38] sm:$0xff]
    %v382 = vld [vmem:[%s4 + $0x40] sm:$0xff]
    %v383 = vld [vmem:[%s4 + $0x48] sm:$0xff]
    %v384 = vld [vmem:[%s4 + $0x50] sm:$0xff]
    %v385 = vld [vmem:[%s4 + $0x58] sm:$0xff]
    %v386 = vld [vmem:[%s4 + $0x60] sm:$0xff]
    %v387 = vld [vmem:[%s4 + $0x68] sm:$0xff]
    %v388 = vld [vmem:[%s4 + $0x70] sm:$0xff]
    %v389 = vld [vmem:[%s4 + $0x78] sm:$0xff]
    %v390 = vld [vmem:[%s5] sm:$0xf]
    %v391 = vperm.slane %v390, 0
    %v393 = vsel %vm126, %v370, 0
    %v396 = vsel %vm126, %v371, 0
    %v399 = vsel %vm126, %v372, 0
    %v402 = vsel %vm126, %v373, 0
    %404 = vmatpush.msra.mxu0 0.0
    %405 = vmatpush.msra.mxu0 0.0
    %406 = vmatpush.msra.mxu0 0.0
    %407 = vmatpush.msra.mxu0 0.0
    %408 = vmatpush.msra.mxu0 0.0
    %409 = vmatpush.msra.mxu0 0.0
    %410 = vmatpush.msra.mxu0 0.0
    %411 = vmatpush.msra.mxu0 0.0
    %412 = vmatpush.msra.mxu0 0.0
    %413 = vmatpush.msra.mxu0 0.0
    %414 = vmatpush.msra.mxu0 0.0
    %415 = vmatpush.msra.mxu0 0.0
    %416 = vmatpush.msra.mxu0 %v377
    %417 = vmatpush.msra.mxu0 %v376
    %418 = vmatpush.msra.mxu0 %v375
    %419 = vmatpush.msra.mxu0 %v374
    %420 = vmatmul.f32.gmra.mxu0 %v393
    %v421 = vpop.f32.mrf.mxu0
    %v422 = vadd.f32 %v391, %v421
    %423 = vmatmul.f32.gmra.mxu0 %v396
    %v424 = vpop.f32.mrf.mxu0
    %v425 = vadd.f32 %v391, %v424
    %426 = vmatmul.f32.gmra.mxu0 %v399
    %v427 = vpop.f32.mrf.mxu0
    %v428 = vadd.f32 %v391, %v427
    %429 = vmatmul.f32.gmra.mxu0 %v402
    %v430 = vpop.f32.mrf.mxu0
    %v431 = vadd.f32 %v391, %v430
    %432 = vdwg.mxu0
    %v433 = vmax.f32 %v422, 0.0
    %v434 = vmax.f32 %v425, 0.0
    %v435 = vmax.f32 %v428, 0.0
    %v436 = vmax.f32 %v431, 0.0
    %v437 = vperm.slane %v390, 1
    %438 = vmatpush.msra.mxu0 0.0
    %439 = vmatpush.msra.mxu0 0.0
    %440 = vmatpush.msra.mxu0 0.0
    %441 = vmatpush.msra.mxu0 0.0
    %442 = vmatpush.msra.mxu0 0.0
    %443 = vmatpush.msra.mxu0 0.0
    %444 = vmatpush.msra.mxu0 0.0
    %445 = vmatpush.msra.mxu0 0.0
    %446 = vmatpush.msra.mxu0 0.0
    %447 = vmatpush.msra.mxu0 0.0
    %448 = vmatpush.msra.mxu0 0.0
    %449 = vmatpush.msra.mxu0 0.0
    %450 = vmatpush.msra.mxu0 %v381
    %451 = vmatpush.msra.mxu0 %v380
    %452 = vmatpush.msra.mxu0 %v379
    %453 = vmatpush.msra.mxu0 %v378
    %454 = vmatmul.f32.gmra.mxu0 %v393
    %v455 = vpop.f32.mrf.mxu0
    %v456 = vadd.f32 %v437, %v455
    %457 = vmatmul.f32.gmra.mxu0 %v396
    %v458 = vpop.f32.mrf.mxu0
    %v459 = vadd.f32 %v437, %v458
    %460 = vmatmul.f32.gmra.mxu0 %v399
    %v461 = vpop.f32.mrf.mxu0
    %v462 = vadd.f32 %v437, %v461
    %463 = vmatmul.f32.gmra.mxu0 %v402
    %v464 = vpop.f32.mrf.mxu0
    %v465 = vadd.f32 %v437, %v464
    %466 = vdwg.mxu0
    %v467 = vmax.f32 %v456, 0.0
    %v468 = vmax.f32 %v459, 0.0
    %v469 = vmax.f32 %v462, 0.0
    %v470 = vmax.f32 %v465, 0.0
    %v472 = vsel %vm126, %v433, 0
    %v475 = vsel %vm126, %v434, 0
    %v478 = vsel %vm126, %v435, 0
    %v481 = vsel %vm126, %v436, 0
    %483 = vmatpush.msra.mxu0 0.0
    %484 = vmatpush.msra.mxu0 0.0
    %485 = vmatpush.msra.mxu0 0.0
    %486 = vmatpush.msra.mxu0 0.0
    %487 = vmatpush.msra.mxu0 0.0
    %488 = vmatpush.msra.mxu0 0.0
    %489 = vmatpush.msra.mxu0 0.0
    %490 = vmatpush.msra.mxu0 0.0
    %491 = vmatpush.msra.mxu0 0.0
    %492 = vmatpush.msra.mxu0 0.0
    %493 = vmatpush.msra.mxu0 0.0
    %494 = vmatpush.msra.mxu0 0.0
    %495 = vmatpush.msra.mxu0 %v385
    %496 = vmatpush.msra.mxu0 %v384
    %497 = vmatpush.msra.mxu0 %v383
    %498 = vmatpush.msra.mxu0 %v382
    %499 = vmatmul.f32.gmra.mxu0 %v472
    %v500 = vpop.f32.mrf.mxu0
    %v501 = vadd.f32 0.0, %v500
    %502 = vmatmul.f32.gmra.mxu0 %v475
    %v503 = vpop.f32.mrf.mxu0
    %v504 = vadd.f32 0.0, %v503
    %505 = vmatmul.f32.gmra.mxu0 %v478
    %v506 = vpop.f32.mrf.mxu0
    %v507 = vadd.f32 0.0, %v506
    %508 = vmatmul.f32.gmra.mxu0 %v481
    %v509 = vpop.f32.mrf.mxu0
    %v510 = vadd.f32 0.0, %v509
    %511 = vdwg.mxu0
    %vm512 = vcmp.gt.f32.partialorder %v501, 0.0
    %vm513 = vcmp.gt.f32.partialorder %v504, 0.0
    %vm514 = vcmp.gt.f32.partialorder %v507, 0.0
    %vm515 = vcmp.gt.f32.partialorder %v510, 0.0
    %v516 = vmul.f32 %v501, 0.2
    %v517 = vmul.f32 %v504, 0.2
    %v518 = vmul.f32 %v507, 0.2
    %v519 = vmul.f32 %v510, 0.2
    %v520 = vsel %vm512, %v501, %v516
    %v521 = vsel %vm513, %v504, %v517
    %v522 = vsel %vm514, %v507, %v518
    %v523 = vsel %vm515, %v510, %v519
    %524 = vmatpush.msra.mxu0 0.0
    %525 = vmatpush.msra.mxu0 0.0
    %526 = vmatpush.msra.mxu0 0.0
    %527 = vmatpush.msra.mxu0 0.0
    %528 = vmatpush.msra.mxu0 0.0
    %529 = vmatpush.msra.mxu0 0.0
    %530 = vmatpush.msra.mxu0 0.0
    %531 = vmatpush.msra.mxu0 0.0
    %532 = vmatpush.msra.mxu0 0.0
    %533 = vmatpush.msra.mxu0 0.0
    %534 = vmatpush.msra.mxu0 0.0
    %535 = vmatpush.msra.mxu0 0.0
    %536 = vmatpush.msra.mxu0 %v389
    %537 = vmatpush.msra.mxu0 %v388
    %538 = vmatpush.msra.mxu0 %v387
    %539 = vmatpush.msra.mxu0 %v386
    %540 = vmatmul.f32.gmra.mxu0 %v472
    %v541 = vpop.f32.mrf.mxu0
    %v542 = vadd.f32 0.0, %v541
    %543 = vmatmul.f32.gmra.mxu0 %v475
    %v544 = vpop.f32.mrf.mxu0
    %v545 = vadd.f32 0.0, %v544
    %546 = vmatmul.f32.gmra.mxu0 %v478
    %v547 = vpop.f32.mrf.mxu0
    %v548 = vadd.f32 0.0, %v547
    %549 = vmatmul.f32.gmra.mxu0 %v481
    %v550 = vpop.f32.mrf.mxu0
    %v551 = vadd.f32 0.0, %v550
    %552 = vdwg.mxu0
    %vm553 = vcmp.gt.f32.partialorder %v542, 0.0
    %vm554 = vcmp.gt.f32.partialorder %v545, 0.0
    %vm555 = vcmp.gt.f32.partialorder %v548, 0.0
    %vm556 = vcmp.gt.f32.partialorder %v551, 0.0
    %v557 = vmul.f32 %v542, 0.2
    %v558 = vmul.f32 %v545, 0.2
    %v559 = vmul.f32 %v548, 0.2
    %v560 = vmul.f32 %v551, 0.2
    %v561 = vsel %vm553, %v542, %v557
    %v562 = vsel %vm554, %v545, %v558
    %v563 = vsel %vm555, %v548, %v559
    %v564 = vsel %vm556, %v551, %v560
    %565 = vmatpush.msra.mxu0 0.0
    %566 = vmatpush.msra.mxu0 0.0
    %567 = vmatpush.msra.mxu0 0.0
    %568 = vmatpush.msra.mxu0 0.0
    %569 = vmatpush.msra.mxu0 0.0
    %570 = vmatpush.msra.mxu0 0.0
    %571 = vmatpush.msra.mxu0 0.0
    %572 = vmatpush.msra.mxu0 0.0
    %573 = vmatpush.msra.mxu0 0.0
    %574 = vmatpush.msra.mxu0 0.0
    %575 = vmatpush.msra.mxu0 0.0
    %576 = vmatpush.msra.mxu0 0.0
    %577 = vmatpush.msra.mxu0 %v470
    %578 = vmatpush.msra.mxu0 %v469
    %579 = vmatpush.msra.mxu0 %v468
    %580 = vmatpush.msra.mxu0 %v467
    %581 = vmatmul.f32.gmra.mxu0 %v222
    %v582 = vpop.f32.mrf.mxu0
    %v583 = vadd.f32 0.0, %v582
    %584 = vmatmul.f32.gmra.mxu0 %v225
    %v585 = vpop.f32.mrf.mxu0
    %v586 = vadd.f32 0.0, %v585
    %587 = vmatmul.f32.gmra.mxu0 %v228
    %v588 = vpop.f32.mrf.mxu0
    %v589 = vadd.f32 0.0, %v588
    %590 = vmatmul.f32.gmra.mxu0 %v231
    %v591 = vpop.f32.mrf.mxu0
    %v592 = vadd.f32 0.0, %v591
    %593 = vdwg.mxu0
    %v594 = vmul.f32 %v561, %v467
    %v595 = vmul.f32 %v562, %v468
    %v596 = vmul.f32 %v563, %v469
    %v597 = vmul.f32 %v564, %v470
    %598 = vmatpush.msra.mxu0 0.0
    %599 = vmatpush.msra.mxu0 0.0
    %600 = vmatpush.msra.mxu0 0.0
    %601 = vmatpush.msra.mxu0 0.0
    %602 = vmatpush.msra.mxu0 0.0
    %603 = vmatpush.msra.mxu0 0.0
    %604 = vmatpush.msra.mxu0 0.0
    %605 = vmatpush.msra.mxu0 0.0
    %606 = vmatpush.msra.mxu0 0.0
    %607 = vmatpush.msra.mxu0 0.0
    %608 = vmatpush.msra.mxu0 0.0
    %609 = vmatpush.msra.mxu0 0.0
    %610 = vmatpush.msra.mxu0 %v597
    %611 = vmatpush.msra.mxu0 %v596
    %612 = vmatpush.msra.mxu0 %v595
    %613 = vmatpush.msra.mxu0 %v594
    %614 = vmatmul.f32.gmra.mxu0 %v222
    %v615 = vpop.f32.mrf.mxu0
    %v616 = vadd.f32 0.0, %v615
    %617 = vmatmul.f32.gmra.mxu0 %v225
    %v618 = vpop.f32.mrf.mxu0
    %v619 = vadd.f32 0.0, %v618
    %620 = vmatmul.f32.gmra.mxu0 %v228
    %v621 = vpop.f32.mrf.mxu0
    %v622 = vadd.f32 0.0, %v621
    %623 = vmatmul.f32.gmra.mxu0 %v231
    %v624 = vpop.f32.mrf.mxu0
    %v625 = vadd.f32 0.0, %v624
    %626 = vdwg.mxu0
    %v627 = vmul.f32 %v520, %v583
    %v628 = vmul.f32 %v521, %v586
    %v629 = vmul.f32 %v522, %v589
    %v630 = vmul.f32 %v523, %v592
    %v631 = vadd.f32 %v627, %v616
    %v632 = vadd.f32 %v628, %v619
    %v633 = vadd.f32 %v629, %v622
    %v634 = vadd.f32 %v630, %v625
    %v635 = vsel %vm126, %v631, 0.0
    %v636 = vsel %vm126, %v632, 0.0
    %v637 = vadd.f32 %v635, %v636
    %v638 = vsel %vm126, %v633, 0.0
    %v639 = vadd.f32 %v637, %v638
    %v640 = vsel %vm126, %v634, 0.0
    %v641 = vadd.f32 %v639, %v640
    %v642 = vrot.slane %v641, 4
    %v643 = vadd.f32 %v641, %v642
    %v644 = vrot.slane %v643, 2
    %v645 = vadd.f32 %v643, %v644
    %v646 = vrot.slane %v645, 1
    %v647 = vadd.f32 %v645, %v646
    %v648 = vmul.f32 %v647, %v322
    %v649 = vmul.f32 %v631, %v631
    %v650 = vmul.f32 %v632, %v632
    %v651 = vmul.f32 %v633, %v633
    %v652 = vmul.f32 %v634, %v634
    %v653 = vsel %vm126, %v649, 0.0
    %v654 = vsel %vm126, %v650, 0.0
    %v655 = vadd.f32 %v653, %v654
    %v656 = vsel %vm126, %v651, 0.0
    %v657 = vadd.f32 %v655, %v656
    %v658 = vsel %vm126, %v652, 0.0
    %v659 = vadd.f32 %v657, %v658
    %v660 = vrot.slane %v659, 4
    %v661 = vadd.f32 %v659, %v660
    %v662 = vrot.slane %v661, 2
    %v663 = vadd.f32 %v661, %v662
    %v664 = vrot.slane %v663, 1
    %v665 = vadd.f32 %v663, %v664
    %v666 = vmul.f32 %v665, %v322
    %v667 = vmul.f32 %v648, %v648
    %v668 = vsub.f32 %v666, %v667
    %v669 = vmax.f32 %v668, 0.0
    %v670 = vsub.f32 %v631, %v648
    %v671 = vsub.f32 %v632, %v648
    %v672 = vsub.f32 %v633, %v648
    %v673 = vsub.f32 %v634, %v648
    %v674 = vadd.f32 %v669, 1e-09
    %v675 = vrsqrt.pop %v674
    %v676 = vmul.f32 %v675, %v674
    %v677 = vmul.f32 %v676, %v675
    %v678 = vmul.f32 0.5, %v677
    %v679 = vsub.f32 1.5, %v678
    %v680 = vmul.f32 %v675, %v679
    %vm681 = vweird.f32 %v674
    %vm682 = vweird.f32 %v675
    %vm683 = vmor %vm681, %vm682
    %v684 = vsel %vm683, %v675, %v680
    %v685 = vmul.f32 %v670, %v684
    %v686 = vmul.f32 %v671, %v684
    %v687 = vmul.f32 %v672, %v684
    %v688 = vmul.f32 %v673, %v684
    %v689 = vperm.slane %v390, 2
    %v690 = vmul.f32 %v685, %v689
    %v691 = vmul.f32 %v686, %v689
    %v692 = vmul.f32 %v687, %v689
    %v693 = vmul.f32 %v688, %v689
    %v694 = vperm.slane %v390, 3
    %v695 = vadd.f32 %v690, %v694
    %v696 = vadd.f32 %v691, %v694
    %v697 = vadd.f32 %v692, %v694
    %v698 = vadd.f32 %v693, %v694
    %699 = vst.msk [vmem:[#allocation2] sm:$0xff] %vm126, %v695
    %700 = vst.msk [vmem:[#allocation2 + $0x8] sm:$0xff] %vm126, %v696
    %701 = vst.msk [vmem:[#allocation2 + $0x10] sm:$0xff] %vm126, %v697
    %702 = vst.msk [vmem:[#allocation2 + $0x18] sm:$0xff] %vm126, %v698
    // Predicated region
    $region26: #{_lambda_.1} parent=1 // pred_check
      _
    $region27: #{_lambda_.1} parent=1 // pred_check_branch
      %704 = sbr.rel (0) target = $region29
    $region28: #{_lambda_.1} parent=1 // pred_region
      %706 = vsyncadd [#allocation3], 0
      %s707 = sshll.u32 [#allocation2], 4
      %s708 = int_to_ptr.vmem [resolvable:$true] %s707
      %s709 = sshll.u32 %s6, 4
      %s710 = int_to_ptr.hbm [resolvable:$true] %s709
      %715 = dma.vmem_to_hbm [thread:$0]  %s708, 512, %s710, [#allocation3], 128, 128, 8
    $region29: #{_lambda_.1} parent=1 // pred_fallthru
      _
    // Predicated region
    $region30: #{_lambda_.1} parent=1 // pred_check
      _
    $region31: #{_lambda_.1} parent=1 // pred_check_branch
      %717 = sbr.rel (0) target = $region33
    $region32: #{_lambda_.1} parent=1 // pred_region
      %719 = dma.done [#allocation3], 512
    $region33: #{_lambda_.1} parent=1 // pred_fallthru
      _
    %720 = vsyncpa [#allocation3], 1

</llo_original>
